<compile_context>
chip_gen: v7x
topology: tpu7x:2x2x1
jax: 0.10.0
libtpu: 0.0.40
codegen_flags: <defaults>
</compile_context>

<pallas_src>
import functools

import jax
import jax.numpy as jnp
from jax.experimental import pallas as pl
from jax.experimental.pallas import tpu as pltpu


def _round_up(x, m):
    return ((x + m - 1) // m) * m


# ---------------------------------------------------------------------------
# Fused dual-encoder kernel (PointNet-lite for encoderG and encoderC).
#   x: (2, B, N, 3) f32  (slot 0 = encoderG, slot 1 = encoderC)  ->  c: (2, B, 1, c_dim) f32
# grid = (2, B, N // n_tile), dimension_semantics = ("parallel", "parallel", "arbitrary")
# ---------------------------------------------------------------------------
def _encoder_kernel(x_ref, w1_ref, b1_ref, w2_ref, b2_ref, c_ref, acc_ref,
                    *, n_tile, acc_rows):
    n = pl.program_id(2)

    @pl.when(n == 0)
    def _init():
        acc_ref[...] = jnp.full(acc_ref.shape, -jnp.inf, dtype=acc_ref.dtype)

    x = x_ref[...].astype(jnp.bfloat16)                                # (n_tile, 3)
    feat = jnp.dot(x, w1_ref[...], preferred_element_type=jnp.float32)
    feat = jnp.maximum(feat + b1_ref[...], 0.0)                        # (n_tile, H) f32

    # Parallel running max: fold the tile into `acc_rows` independent max chains (pure VPU);
    # the single cross-sublane reduce is deferred to the finalize step (once per batch).
    part = jnp.max(feat.reshape(n_tile // acc_rows, acc_rows, feat.shape[-1]), axis=0)
    acc_ref[...] = jnp.maximum(acc_ref[...], part)

    @pl.when(n == pl.num_programs(2) - 1)
    def _finalize():
        pooled = jnp.max(acc_ref[...], axis=0, keepdims=True)          # (1, H) f32
        c = jnp.dot(pooled.astype(jnp.bfloat16), w2_ref[...],
                    preferred_element_type=jnp.float32) + b2_ref[...]
        c_ref[...] = c.astype(c_ref.dtype)


def dual_pointnet_encoder(x_stacked, enc_params, *, n_tile, acc_rows=32):
    """x_stacked: (2, B, N, 3) f32.  Returns (2, B, 1, c_dim) f32."""
    _, B, N, pdim = x_stacked.shape
    assert pdim == 3
    acc_rows = min(acc_rows, n_tile)
    assert N % n_tile == 0 and n_tile % acc_rows == 0 and n_tile % 8 == 0
    w1, b1, w2, b2 = (enc_params[k] for k in ("w1", "b1", "w2", "b2"))
    H = w1.shape[-1]
    c_dim = w2.shape[-1]

    kernel = functools.partial(_encoder_kernel, n_tile=n_tile, acc_rows=acc_rows)
    return pl.pallas_call(
        kernel,
        out_shape=jax.ShapeDtypeStruct((2, B, 1, c_dim), jnp.float32),
        grid_spec=pltpu.PrefetchScalarGridSpec(
            num_scalar_prefetch=0,
            grid=(2, B, N // n_tile),
            in_specs=[
                pl.BlockSpec((None, None, n_tile, 3), lambda g, b, n: (g, b, n, 0)),
                pl.BlockSpec((None, 3, H), lambda g, b, n: (g, 0, 0)),      # VMEM-resident
                pl.BlockSpec((None, 1, H), lambda g, b, n: (g, 0, 0)),
                pl.BlockSpec((None, H, c_dim), lambda g, b, n: (g, 0, 0)),
                pl.BlockSpec((None, 1, c_dim), lambda g, b, n: (g, 0, 0)),
            ],
            out_specs=pl.BlockSpec((None, None, 1, c_dim), lambda g, b, n: (g, b, 0, 0)),
            scratch_shapes=[pltpu.VMEM((acc_rows, H), jnp.float32)],        # running max
        ),
        compiler_params=pltpu.CompilerParams(
            dimension_semantics=("parallel", "parallel", "arbitrary")),
    )(x_stacked, w1, b1, w2, b2)


# ---------------------------------------------------------------------------
# Decoder kernel: fused MLP  (p, cproj) -> tanh(logits)[:, :8]  as a compact bf16 slab.
# grid = (B, T_pad // t_tile), dimension_semantics = ("parallel", "parallel")
# ---------------------------------------------------------------------------
def _decoder_kernel(cproj_ref, p_ref, wp_ref, w2_ref, b2_ref, wo_ref, bo_ref, out_ref):
    p_tile = p_ref[...].astype(jnp.bfloat16)                           # (t_tile, 3)
    h = jnp.dot(p_tile, wp_ref[...], preferred_element_type=jnp.float32)
    h = jnp.maximum(h + cproj_ref[...], 0.0)                           # (t_tile, H) f32
    h = jnp.dot(h.astype(jnp.bfloat16), w2_ref[...],
                preferred_element_type=jnp.float32) + b2_ref[...]
    h = jnp.maximum(h, 0.0)
    logits = jnp.dot(h.astype(jnp.bfloat16), wo_ref[...],
                     preferred_element_type=jnp.float32)               # (t_tile, 128)
    out_w = out_ref.shape[-1]
    logits = logits[:, :out_w] + bo_ref[...]                           # (t_tile, 8)
    out_ref[...] = jnp.tanh(logits).astype(out_ref.dtype)              # bf16, 16x fewer EUP ops


def decoder_forward(p_pad, cproj, dec_params, *, t_tile):
    B, T_pad, pdim = p_pad.shape
    assert pdim == 3 and T_pad % t_tile == 0 and t_tile % 8 == 0
    wp, w2, b2, wo, bo = (dec_params[k] for k in ("wp", "w2", "b2", "wo", "bo"))
    H = wp.shape[-1]
    out_w = bo.shape[-1]        # 8 lane-padded color channels (first 3 are real)

    return pl.pallas_call(
        _decoder_kernel,
        out_shape=jax.ShapeDtypeStruct((B, T_pad, out_w), jnp.bfloat16),
        grid_spec=pltpu.PrefetchScalarGridSpec(
            num_scalar_prefetch=0,
            grid=(B, T_pad // t_tile),
            in_specs=[
                pl.BlockSpec((None, 1, H), lambda b, t: (b, 0, 0)),         # cproj (per batch)
                pl.BlockSpec((None, t_tile, 3), lambda b, t: (b, t, 0)),    # raw f32 points
                pl.BlockSpec((3, H), lambda b, t: (0, 0)),                  # VMEM-resident weights
                pl.BlockSpec((H, H), lambda b, t: (0, 0)),
                pl.BlockSpec((1, H), lambda b, t: (0, 0)),
                pl.BlockSpec((H, wo.shape[-1]), lambda b, t: (0, 0)),
                pl.BlockSpec((1, out_w), lambda b, t: (0, 0)),
            ],
            out_specs=pl.BlockSpec((None, t_tile, out_w), lambda b, t: (b, t, 0)),
        ),
        # No cross-iteration state -> both axes parallel (v7x megacore works even at B=1).
        compiler_params=pltpu.CompilerParams(
            dimension_semantics=("parallel", "parallel")),
    )(cproj, p_pad, wp, w2, b2, wo, bo)


# ---------------------------------------------------------------------------
# Forward wrapper (equivalent of OccupancyNetwork.forward)
# ---------------------------------------------------------------------------
def occupancy_network_forward(p, input_g, input_c, params, *, n_tile=1024, t_tile=512,
                              sample=True):
    """Returns tanh(decoder(p, z, [c0, c1])) of shape (B, T, 3) f32.

    The latent z comes from the default prior Normal([], []) which has zero event dims,
    so z is a width-0 tensor: nothing is allocated, sampled, or concatenated for it.
    """
    del sample  # z has width 0 -> sampling is a no-op
    B, T, pdim = p.shape
    assert pdim == 3 and input_g.shape == input_c.shape
    assert t_tile % 16 == 0

    # --- encoders: one fused pallas_call for encoderG + encoderC ---
    N = input_g.shape[1]
    n_tile_eff = min(n_tile, N)
    x_stacked = jnp.stack([input_g, input_c], axis=0)                  # (2, B, N, 3)
    c_s = dual_pointnet_encoder(x_stacked, params["encoders"], n_tile=n_tile_eff)
    c_cat = jnp.concatenate([c_s[0, :, 0, :], c_s[1, :, 0, :]], axis=-1)   # (B, 2*c_dim)

    # --- per-batch conditioning projection: tiny XLA matmul, keeps the T axis parallel ---
    dec = params["decoder"]
    cproj = (c_cat @ dec["wc"] + dec["b1"])[:, None, :]                # (B, 1, H) f32

    # --- decoder over query points (pad only the T remainder; bf16 cast happens in-kernel) ---
    if T <= t_tile:
        t_tile_eff = _round_up(T, 16)
        T_pad = t_tile_eff
    else:
        t_tile_eff = t_tile
        T_pad = _round_up(T, t_tile_eff)
    p_pad = jnp.pad(p, ((0, 0), (0, T_pad - T), (0, 0)))

    out = decoder_forward(p_pad, cproj, dec, t_tile=t_tile_eff)        # (B, T_pad, 8) bf16
    return out[:, :T, :3].astype(jnp.float32)


# ---------------------------------------------------------------------------
# Deterministic synthetic parameters
# ---------------------------------------------------------------------------
def init_params(key, *, enc_hidden=128, c_dim=64, dec_hidden=128, out_dim=3, out_pad=8):
    keys = iter(jax.random.split(key, 24))

    def w(shape, scale=0.1):
        return scale * jax.random.normal(next(keys), shape, dtype=jnp.float32)

    # Two PointNet-lite encoders (G, C) stacked along a leading axis of 2 so both
    # run in a single fused pallas_call.
    encoders = {
        "w1": jnp.stack([w((3, enc_hidden)), w((3, enc_hidden))]).astype(jnp.bfloat16),
        "b1": jnp.stack([w((1, enc_hidden)), w((1, enc_hidden))]),
        "w2": jnp.stack([w((enc_hidden, c_dim)), w((enc_hidden, c_dim))]).astype(jnp.bfloat16),
        "b2": jnp.stack([w((1, c_dim)), w((1, c_dim))]),
    }

    # Decoder: conditioning matmuls merged into one (2*c_dim, H) matrix (kept f32: it runs as a
    # tiny per-batch XLA matmul), output matrix lane-padded to 128 columns (cols >= 3 are zero).
    wo = jnp.zeros((dec_hidden, 128), jnp.float32).at[:, :out_dim].set(w((dec_hidden, out_dim)))
    bo = jnp.zeros((1, out_pad), jnp.float32).at[:, :out_dim].set(w((1, out_dim)))
    decoder = {
        "wp": w((3, dec_hidden)).astype(jnp.bfloat16),
        "wc": w((2 * c_dim, dec_hidden)),
        "b1": w((1, dec_hidden)),
        "w2": w((dec_hidden, dec_hidden)).astype(jnp.bfloat16),
        "b2": w((1, dec_hidden)),
        "wo": wo.astype(jnp.bfloat16),
        "bo": bo,
    }
    return {"encoders": encoders, "decoder": decoder}


# Pure-JAX f32 reference of the same forward pass (loose numeric sanity check).
def reference_forward(p, input_g, input_c, params):
    enc = params["encoders"]

    def enc_ref(x, i):
        feat = jnp.maximum(
            jnp.einsum("bnd,dh->bnh", x, enc["w1"][i].astype(jnp.float32)) + enc["b1"][i], 0.0)
        pooled = feat.max(axis=1)
        return pooled @ enc["w2"][i].astype(jnp.float32) + enc["b2"][i]

    c_cat = jnp.concatenate([enc_ref(input_g, 0), enc_ref(input_c, 1)], axis=-1)
    dec = params["decoder"]
    cproj = c_cat @ dec["wc"] + dec["b1"]                              # (B, H)
    h = jnp.maximum(
        jnp.einsum("btd,dh->bth", p, dec["wp"].astype(jnp.float32)) + cproj[:, None], 0.0)
    h = jnp.maximum(
        jnp.einsum("bth,hk->btk", h, dec["w2"].astype(jnp.float32)) + dec["b2"], 0.0)
    logits = (jnp.einsum("bth,hk->btk", h, dec["wo"].astype(jnp.float32)[:, :3])
              + dec["bo"][:, :3])
    return jnp.tanh(logits)


if __name__ == "__main__":
    key = jax.random.PRNGKey(0)
    k_p, k_g, k_c, k_w = jax.random.split(key, 4)

    B, N, T = 2, 256, 1000   # small demo shapes; T deliberately not a multiple of t_tile
    p = jax.random.normal(k_p, (B, T, 3), dtype=jnp.float32)
    input_g = jax.random.normal(k_g, (B, N, 3), dtype=jnp.float32)
    input_c = jax.random.normal(k_c, (B, N, 3), dtype=jnp.float32)

    params = init_params(k_w)

    out = occupancy_network_forward(p, input_g, input_c, params, n_tile=1024, t_tile=512)
    out = jax.block_until_ready(out)
    assert out.shape == (B, T, 3), out.shape

    ref = reference_forward(p, input_g, input_c, params)
    max_err = float(jnp.max(jnp.abs(out - ref)))
    assert max_err < 0.1, f"max abs error vs reference too large: {max_err}"

    print("KERNEL_OK")
</pallas_src>

<mosaic_0001>
module attributes {stable_mosaic.version = 11 : i64} {
  func.func @_encoder_kernel(%arg0: i32, %arg1: i32, %arg2: i32, %arg3: memref<1x1x256x3xf32, #tpu.memory_space<vmem>>, %arg4: memref<1x3x128xbf16, #tpu.memory_space<vmem>>, %arg5: memref<1x1x128xf32, #tpu.memory_space<vmem>>, %arg6: memref<1x128x64xbf16, #tpu.memory_space<vmem>>, %arg7: memref<1x1x64xf32, #tpu.memory_space<vmem>>, %arg8: memref<1x1x1x64xf32, #tpu.memory_space<vmem>>, %arg9: memref<32x128xf32, #tpu.memory_space<vmem>>) attributes {dimension_semantics = [#tpu.dimension_semantics<parallel>, #tpu.dimension_semantics<parallel>, #tpu.dimension_semantics<arbitrary>], iteration_bounds = array<i64: 2, 2, 1>, scalar_prefetch = 0 : i64, scratch_operands = 1 : i64, tpu.core_type = #tpu.core_type<tc>, window_params = [{transform_indices = @transform_0, window_bounds = array<i64: 1, 1, 256, 3>}, {transform_indices = @transform_1, window_bounds = array<i64: 1, 3, 128>}, {transform_indices = @transform_2, window_bounds = array<i64: 1, 1, 128>}, {transform_indices = @transform_3, window_bounds = array<i64: 1, 128, 64>}, {transform_indices = @transform_4, window_bounds = array<i64: 1, 1, 64>}, {transform_indices = @transform_5, window_bounds = array<i64: 1, 1, 1, 64>}]} {
    %c0_i32 = arith.constant 0 : i32
    %0 = arith.cmpi eq, %arg2, %c0_i32 : i32
    %1 = arith.extui %0 : i1 to i32
    %c0_i32_0 = arith.constant 0 : i32
    %2 = arith.cmpi ne, %1, %c0_i32_0 : i32
    scf.if %2 {
      %cst_18 = arith.constant 0xFF800000 : f32
      %23 = vector.broadcast %cst_18 : f32 to vector<32x128xf32>
      %c0_19 = arith.constant 0 : index
      %c0_20 = arith.constant 0 : index
      %24 = vector.load %arg9[%c0_19, %c0_20] : memref<32x128xf32, #tpu.memory_space<vmem>>, vector<32x128xf32>
      tpu.vector_store %arg9[%c0_19, %c0_20], %23 {strides = array<i32>} : memref<32x128xf32, #tpu.memory_space<vmem>>, vector<32x128xf32>,
    } else {
    }
    %c0 = arith.constant 0 : index
    %c0_1 = arith.constant 0 : index
    %c0_2 = arith.constant 0 : index
    %c0_3 = arith.constant 0 : index
    %3 = vector.load %arg3[%c0, %c0_1, %c0_2, %c0_3] : memref<1x1x256x3xf32, #tpu.memory_space<vmem>>, vector<1x1x256x3xf32>
    %4 = vector.shape_cast %3 : vector<1x1x256x3xf32> to vector<256x3xf32>
    %5 = arith.truncf %4 : vector<256x3xf32> to vector<256x3xbf16>
    %c0_4 = arith.constant 0 : index
    %c0_5 = arith.constant 0 : index
    %c0_6 = arith.constant 0 : index
    %6 = vector.load %arg4[%c0_4, %c0_5, %c0_6] : memref<1x3x128xbf16, #tpu.memory_space<vmem>>, vector<1x3x128xbf16>
    %7 = vector.shape_cast %6 : vector<1x3x128xbf16> to vector<3x128xbf16>
    %cst = arith.constant dense<0.000000e+00> : vector<256x128xf32>
    %8 = tpu.matmul %5, %7, %cst {dimension_numbers = #tpu.dot_dimension_numbers<[1], [0], [0], [1], [0, 0, 1, 1], [], []>} : vector<256x3xbf16>, vector<3x128xbf16>, vector<256x128xf32> -> vector<256x128xf32>
    %c0_7 = arith.constant 0 : index
    %c0_8 = arith.constant 0 : index
    %c0_9 = arith.constant 0 : index
    %9 = vector.load %arg5[%c0_7, %c0_8, %c0_9] : memref<1x1x128xf32, #tpu.memory_space<vmem>>, vector<1x1x128xf32>
    %10 = vector.shape_cast %9 : vector<1x1x128xf32> to vector<1x128xf32>
    %11 = vector.broadcast %10 : vector<1x128xf32> to vector<256x128xf32>
    %12 = arith.addf %8, %11 : vector<256x128xf32>
    %cst_10 = arith.constant 0.000000e+00 : f32
    %13 = vector.broadcast %cst_10 : f32 to vector<256x128xf32>
    %14 = arith.maximumf %12, %13 : vector<256x128xf32>
    %15 = vector.shape_cast %14 : vector<256x128xf32> to vector<8x32x128xf32>
    %cst_11 = arith.constant dense<0xFF800000> : vector<32x128xf32>
    %16 = vector.multi_reduction <maximumf>, %15, %cst_11 [0] : vector<8x32x128xf32> to vector<32x128xf32>
    %c0_12 = arith.constant 0 : index
    %c0_13 = arith.constant 0 : index
    %17 = vector.load %arg9[%c0_12, %c0_13] : memref<32x128xf32, #tpu.memory_space<vmem>>, vector<32x128xf32>
    %18 = arith.maximumf %17, %16 : vector<32x128xf32>
    %c0_14 = arith.constant 0 : index
    %c0_15 = arith.constant 0 : index
    %19 = vector.load %arg9[%c0_14, %c0_15] : memref<32x128xf32, #tpu.memory_space<vmem>>, vector<32x128xf32>
    tpu.vector_store %arg9[%c0_14, %c0_15], %18 {strides = array<i32>} : memref<32x128xf32, #tpu.memory_space<vmem>>, vector<32x128xf32>,
    %c0_i32_16 = arith.constant 0 : i32
    %20 = arith.cmpi eq, %arg2, %c0_i32_16 : i32
    %21 = arith.extui %20 : i1 to i32
    %c0_i32_17 = arith.constant 0 : i32
    %22 = arith.cmpi ne, %21, %c0_i32_17 : i32
    scf.if %22 {
      %c0_18 = arith.constant 0 : index
      %c0_19 = arith.constant 0 : index
      %23 = vector.load %arg9[%c0_18, %c0_19] : memref<32x128xf32, #tpu.memory_space<vmem>>, vector<32x128xf32>
      %cst_20 = arith.constant dense<0xFF800000> : vector<128xf32>
      %24 = vector.multi_reduction <maximumf>, %23, %cst_20 [0] : vector<32x128xf32> to vector<128xf32>
      %25 = vector.shape_cast %24 : vector<128xf32> to vector<1x128xf32>
      %26 = arith.truncf %25 : vector<1x128xf32> to vector<1x128xbf16>
      %c0_21 = arith.constant 0 : index
      %c0_22 = arith.constant 0 : index
      %c0_23 = arith.constant 0 : index
      %27 = vector.load %arg6[%c0_21, %c0_22, %c0_23] : memref<1x128x64xbf16, #tpu.memory_space<vmem>>, vector<1x128x64xbf16>
      %28 = vector.shape_cast %27 : vector<1x128x64xbf16> to vector<128x64xbf16>
      %cst_24 = arith.constant dense<0.000000e+00> : vector<1x64xf32>
      %29 = tpu.matmul %26, %28, %cst_24 {dimension_numbers = #tpu.dot_dimension_numbers<[1], [0], [0], [1], [0, 0, 1, 1], [], []>} : vector<1x128xbf16>, vector<128x64xbf16>, vector<1x64xf32> -> vector<1x64xf32>
      %c0_25 = arith.constant 0 : index
      %c0_26 = arith.constant 0 : index
      %c0_27 = arith.constant 0 : index
      %30 = vector.load %arg7[%c0_25, %c0_26, %c0_27] : memref<1x1x64xf32, #tpu.memory_space<vmem>>, vector<1x1x64xf32>
      %31 = vector.shape_cast %30 : vector<1x1x64xf32> to vector<1x64xf32>
      %32 = arith.addf %29, %31 : vector<1x64xf32>
      %c0_28 = arith.constant 0 : index
      %c0_29 = arith.constant 0 : index
      %c0_30 = arith.constant 0 : index
      %c0_31 = arith.constant 0 : index
      %33 = vector.load %arg8[%c0_28, %c0_29, %c0_30, %c0_31] : memref<1x1x1x64xf32, #tpu.memory_space<vmem>>, vector<1x1x1x64xf32>
      %34 = vector.shape_cast %33 : vector<1x1x1x64xf32> to vector<1x64xf32>
      %35 = vector.shape_cast %32 : vector<1x64xf32> to vector<1x1x1x64xf32>
      tpu.vector_store %arg8[%c0_28, %c0_29, %c0_30, %c0_31], %35 {strides = array<i32>} : memref<1x1x1x64xf32, #tpu.memory_space<vmem>>, vector<1x1x1x64xf32>,
    } else {
    }
    return
  }
  func.func @transform_0(%arg0: i32, %arg1: i32, %arg2: i32) -> (i32, i32, i32, i32) {
    %c0_i32 = arith.constant 0 : i32
    %c0_i32_0 = arith.constant 0 : i32
    return %arg0, %arg1, %arg2, %c0_i32 : i32, i32, i32, i32
  }
  func.func @transform_1(%arg0: i32, %arg1: i32, %arg2: i32) -> (i32, i32, i32) {
    %c0_i32 = arith.constant 0 : i32
    %c0_i32_0 = arith.constant 0 : i32
    %c0_i32_1 = arith.constant 0 : i32
    return %arg0, %c0_i32, %c0_i32_0 : i32, i32, i32
  }
  func.func @transform_2(%arg0: i32, %arg1: i32, %arg2: i32) -> (i32, i32, i32) {
    %c0_i32 = arith.constant 0 : i32
    %c0_i32_0 = arith.constant 0 : i32
    %c0_i32_1 = arith.constant 0 : i32
    return %arg0, %c0_i32, %c0_i32_0 : i32, i32, i32
  }
  func.func @transform_3(%arg0: i32, %arg1: i32, %arg2: i32) -> (i32, i32, i32) {
    %c0_i32 = arith.constant 0 : i32
    %c0_i32_0 = arith.constant 0 : i32
    %c0_i32_1 = arith.constant 0 : i32
    return %arg0, %c0_i32, %c0_i32_0 : i32, i32, i32
  }
  func.func @transform_4(%arg0: i32, %arg1: i32, %arg2: i32) -> (i32, i32, i32) {
    %c0_i32 = arith.constant 0 : i32
    %c0_i32_0 = arith.constant 0 : i32
    %c0_i32_1 = arith.constant 0 : i32
    return %arg0, %c0_i32, %c0_i32_0 : i32, i32, i32
  }
  func.func @transform_5(%arg0: i32, %arg1: i32, %arg2: i32) -> (i32, i32, i32, i32) {
    %c0_i32 = arith.constant 0 : i32
    %c0_i32_0 = arith.constant 0 : i32
    %c0_i32_1 = arith.constant 0 : i32
    return %arg0, %arg1, %c0_i32, %c0_i32_0 : i32, i32, i32, i32
  }
}

</mosaic_0001>

<llo_original>
// kernel: tpu_custom_call.1
$region0: #{tpu_custom_call.1}
  #allocation0 [shape = 'u32[]', space=smem, size = 0x4, offset = 0x4, fixed_abs, tag = 'smem constant byte address 0x4 - core index']
  #allocation1 [shape = 'u32[144,128]{1,0:T(1,128)}', space=vmem, size = 0x12000, scoped, tag = 'internal scratch']
  #allocation2 [shape = 'f32[32,128]{1,0:T(8,128)}', space=vmem, size = 0x4000, scoped, tag = 'scratch operand']
  %s0 = inlined_call_operand.vmem [shape: f32[2,2,256,3], index: 0, kind: input, shape index: {}]
  %s1 = inlined_call_operand.vmem [shape: bf16[2,3,128], index: 1, kind: input, shape index: {}]
  %s2 = inlined_call_operand.vmem [shape: f32[2,1,128], index: 2, kind: input, shape index: {}]
  %s3 = inlined_call_operand.vmem [shape: bf16[2,128,64], index: 3, kind: input, shape index: {}]
  %s4 = inlined_call_operand.vmem [shape: f32[2,1,64], index: 4, kind: input, shape index: {}]
  %s5 = inlined_call_operand.hbm [shape: f32[2,2,1,64], index: 5, kind: output, shape index: {}]
  %s6 = sld [smem:[#allocation0]]
  $region61: #{tpu_custom_call.1} parent=0
    _
  %s8 = ssub.s32 1, %s6
  %s9 = scalar_select 0, %s8, %s6
  $region1: #{tpu_custom_call.1} parent=0
    #allocation3 [shape = 'u8[1024]{0}', space=vmem, size = 0x400, scoped, tag = 'output window, operand 0']
    #allocation4 [shape = 's32[2]{0}', space=sflag, size = 0x8, scoped, tag = 'scoped memory for tpu_custom_call.1']
    %10 = vsyncpa [#allocation4], 0
    %s11 = scalar_lea.sflag [#allocation4], 1
    %12 = vsyncpa %s11, 0
    loop: start=0, step=1, limit=6
    $region2: #{tpu_custom_call.1} parent=1 // loop_pre_header
      _
    $region3: #{tpu_custom_call.1} parent=1 // loop_header
      %s14 = sphi 0, %s18
      %p15 = scmp.ge.s32.totalorder %s14, 6
      %s21 = sphi 0, %s40
      %s22 = sphi 0, %s36
      %s23 = sphi 0, %s32
      %s24 = sphi 0, %s21
      %s25 = sphi 0, %s22
      %s26 = sphi 0, %s23
      %s27 = sphi 0, %s24
      %s28 = sphi 0, %s25
      %s29 = sphi 0, %s26
      %s47 = sphi 0, %s49
      %s50 = sphi 0, %s47
      %s51 = sphi 0, %s50
      %s67 = sphi 0, %s51
      %s73 = sphi 0, %s75
      %s76 = sphi 0, %s73
      %s77 = sphi 0, %s76
      %s93 = sphi 0, %s77
      %s99 = sphi 0, %s101
      %s102 = sphi 0, %s99
      %s103 = sphi 0, %s102
      %s119 = sphi 0, %s103
      %s125 = sphi 0, %s127
      %s128 = sphi 0, %s125
      %s129 = sphi 0, %s128
      %s145 = sphi 0, %s129
      %s151 = sphi 0, %s153
      %s154 = sphi 0, %s151
      %s155 = sphi 0, %s154
      %s171 = sphi 0, %s155
      %s179 = sphi 0, %s181
      %s182 = sphi 0, %s179
      %s183 = sphi 0, %s182
      %s199 = sphi 0, %s183
    $region4: #{tpu_custom_call.1} parent=1 // loop_header_branch
      %17 = sbr.rel (%p15) target = $region8
    $region5: #{tpu_custom_call.1} parent=1 // loop_body
      %s19 = ssub.s32 %s14, 1
      %s20 = ssub.s32 %s14, 2
      %s30 = sadd.s32 1, %s23
      %p31 = scmp.ge.s32.totalorder %s30, 1
      %s32 = scalar_select %p31, 0, %s30
      %s33 = sadd.s32 1, %s22
      %s34 = scalar_select %p31, %s33, %s22
      %p35 = scmp.ge.s32.totalorder %s34, 2
      %s36 = scalar_select %p35, 0, %s34
      %s37 = sadd.s32 1, %s21
      %s38 = scalar_select %p35, %s37, %s21
      %p39 = scmp.ge.s32.totalorder %s38, 2
      %s40 = scalar_select %p39, 0, %s38
      %s41 = ssub.s32 %s21, %s40
      %s42 = ssub.s32 %s22, %s36
      %s43 = sor.u32 %s41, %s42
      %s44 = ssub.s32 %s23, %s32
      %s45 = sor.u32 %s43, %s44
      %p46 = scmp.eq.s32.totalorder %s45, 0
      %s48 = sadd.s32 %s47, 1
      %s49 = scalar_select %p46, %s47, %s48
      %p52 = pneg %p46
      %p53 = scmp.eq.s32.totalorder %s14, 3
      %p54 = por %p52, %p53
      %p55 = scmp.ne.s32.totalorder %s47, %s50
      %p56 = scmp.eq.s32.totalorder %s14, 0
      %p57 = por %p55, %p56
      %p58 = scmp.ne.s32.totalorder %s47, %s50
      %p59 = scmp.eq.s32.totalorder %s19, 3
      %p60 = por %p58, %p59
      %p61 = scmp.ne.s32.totalorder %s50, %s51
      %p62 = scmp.eq.s32.totalorder %s19, 0
      %p63 = por %p61, %p62
      %p64 = scmp.ne.s32.totalorder %s50, %s51
      %p65 = scmp.eq.s32.totalorder %s20, 3
      %p66 = por %p64, %p65
      %p68 = scmp.ne.s32.totalorder %s51, %s67
      %p69 = scmp.eq.s32.totalorder %s20, 0
      %p70 = por %p68, %p69
      %s71 = ssub.s32 %s21, %s40
      %p72 = scmp.eq.s32.totalorder %s71, 0
      %s74 = sadd.s32 %s73, 1
      %s75 = scalar_select %p72, %s73, %s74
      %p78 = pneg %p72
      %p79 = scmp.eq.s32.totalorder %s14, 3
      %p80 = por %p78, %p79
      %p81 = scmp.ne.s32.totalorder %s73, %s76
      %p82 = scmp.eq.s32.totalorder %s14, 0
      %p83 = por %p81, %p82
      %p84 = scmp.ne.s32.totalorder %s73, %s76
      %p85 = scmp.eq.s32.totalorder %s19, 3
      %p86 = por %p84, %p85
      %p87 = scmp.ne.s32.totalorder %s76, %s77
      %p88 = scmp.eq.s32.totalorder %s19, 0
      %p89 = por %p87, %p88
      %p90 = scmp.ne.s32.totalorder %s76, %s77
      %p91 = scmp.eq.s32.totalorder %s20, 3
      %p92 = por %p90, %p91
      %p94 = scmp.ne.s32.totalorder %s77, %s93
      %p95 = scmp.eq.s32.totalorder %s20, 0
      %p96 = por %p94, %p95
      %s97 = ssub.s32 %s21, %s40
      %p98 = scmp.eq.s32.totalorder %s97, 0
      %s100 = sadd.s32 %s99, 1
      %s101 = scalar_select %p98, %s99, %s100
      %p104 = pneg %p98
      %p105 = scmp.eq.s32.totalorder %s14, 3
      %p106 = por %p104, %p105
      %p107 = scmp.ne.s32.totalorder %s99, %s102
      %p108 = scmp.eq.s32.totalorder %s14, 0
      %p109 = por %p107, %p108
      %p110 = scmp.ne.s32.totalorder %s99, %s102
      %p111 = scmp.eq.s32.totalorder %s19, 3
      %p112 = por %p110, %p111
      %p113 = scmp.ne.s32.totalorder %s102, %s103
      %p114 = scmp.eq.s32.totalorder %s19, 0
      %p115 = por %p113, %p114
      %p116 = scmp.ne.s32.totalorder %s102, %s103
      %p117 = scmp.eq.s32.totalorder %s20, 3
      %p118 = por %p116, %p117
      %p120 = scmp.ne.s32.totalorder %s103, %s119
      %p121 = scmp.eq.s32.totalorder %s20, 0
      %p122 = por %p120, %p121
      %s123 = ssub.s32 %s21, %s40
      %p124 = scmp.eq.s32.totalorder %s123, 0
      %s126 = sadd.s32 %s125, 1
      %s127 = scalar_select %p124, %s125, %s126
      %p130 = pneg %p124
      %p131 = scmp.eq.s32.totalorder %s14, 3
      %p132 = por %p130, %p131
      %p133 = scmp.ne.s32.totalorder %s125, %s128
      %p134 = scmp.eq.s32.totalorder %s14, 0
      %p135 = por %p133, %p134
      %p136 = scmp.ne.s32.totalorder %s125, %s128
      %p137 = scmp.eq.s32.totalorder %s19, 3
      %p138 = por %p136, %p137
      %p139 = scmp.ne.s32.totalorder %s128, %s129
      %p140 = scmp.eq.s32.totalorder %s19, 0
      %p141 = por %p139, %p140
      %p142 = scmp.ne.s32.totalorder %s128, %s129
      %p143 = scmp.eq.s32.totalorder %s20, 3
      %p144 = por %p142, %p143
      %p146 = scmp.ne.s32.totalorder %s129, %s145
      %p147 = scmp.eq.s32.totalorder %s20, 0
      %p148 = por %p146, %p147
      %s149 = ssub.s32 %s21, %s40
      %p150 = scmp.eq.s32.totalorder %s149, 0
      %s152 = sadd.s32 %s151, 1
      %s153 = scalar_select %p150, %s151, %s152
      %p156 = pneg %p150
      %p157 = scmp.eq.s32.totalorder %s14, 3
      %p158 = por %p156, %p157
      %p159 = scmp.ne.s32.totalorder %s151, %s154
      %p160 = scmp.eq.s32.totalorder %s14, 0
      %p161 = por %p159, %p160
      %p162 = scmp.ne.s32.totalorder %s151, %s154
      %p163 = scmp.eq.s32.totalorder %s19, 3
      %p164 = por %p162, %p163
      %p165 = scmp.ne.s32.totalorder %s154, %s155
      %p166 = scmp.eq.s32.totalorder %s19, 0
      %p167 = por %p165, %p166
      %p168 = scmp.ne.s32.totalorder %s154, %s155
      %p169 = scmp.eq.s32.totalorder %s20, 3
      %p170 = por %p168, %p169
      %p172 = scmp.ne.s32.totalorder %s155, %s171
      %p173 = scmp.eq.s32.totalorder %s20, 0
      %p174 = por %p172, %p173
      %s175 = ssub.s32 %s21, %s40
      %s176 = ssub.s32 %s22, %s36
      %s177 = sor.u32 %s175, %s176
      %p178 = scmp.eq.s32.totalorder %s177, 0
      %s180 = sadd.s32 %s179, 1
      %s181 = scalar_select %p178, %s179, %s180
      %p184 = pneg %p178
      %p185 = scmp.eq.s32.totalorder %s14, 3
      %p186 = por %p184, %p185
      %p187 = scmp.ne.s32.totalorder %s179, %s182
      %p188 = scmp.eq.s32.totalorder %s14, 0
      %p189 = por %p187, %p188
      %p190 = scmp.ne.s32.totalorder %s179, %s182
      %p191 = scmp.eq.s32.totalorder %s19, 3
      %p192 = por %p190, %p191
      %p193 = scmp.ne.s32.totalorder %s182, %s183
      %p194 = scmp.eq.s32.totalorder %s19, 0
      %p195 = por %p193, %p194
      %p196 = scmp.ne.s32.totalorder %s182, %s183
      %p197 = scmp.eq.s32.totalorder %s20, 3
      %p198 = por %p196, %p197
      %p200 = scmp.ne.s32.totalorder %s183, %s199
      %p201 = scmp.eq.s32.totalorder %s20, 0
      %p202 = por %p200, %p201
      %p203 = scmp.le.s32.totalorder 1, %s14
      %p204 = scmp.lt.s32.totalorder %s14, 5
      %p205 = pnand %p203, %p204
      %p206 = pneg %p205
      // Predicated region
      $region9: #{tpu_custom_call.1} parent=5 // pred_check
        _
      $region10: #{tpu_custom_call.1} parent=5 // pred_check_branch
        %208 = sbr.rel (%p205) target = $region12
      $region11: #{tpu_custom_call.1} parent=5 // pred_region
        %s209 = ssub.s32 %s14, 1
      $region12: #{tpu_custom_call.1} parent=5 // pred_fallthru
        _
      %p210 = scmp.lt.s32.totalorder %s14, 4
      // Predicated region
      $region13: #{tpu_custom_call.1} parent=5 // pred_check
        %p211 = pneg %p210
      $region14: #{tpu_custom_call.1} parent=5 // pred_check_branch
        %213 = sbr.rel (%p211) target = $region16
      $region15: #{tpu_custom_call.1} parent=5 // pred_region
        // Predicated region
        $region17: #{tpu_custom_call.1} parent=15 // pred_check
          %p214 = pneg %p57
        $region18: #{tpu_custom_call.1} parent=15 // pred_check_branch
          %216 = sbr.rel (%p214) target = $region20
        $region19: #{tpu_custom_call.1} parent=15 // pred_region
          %s217 = smul.u32 32, %s23
          %p218 = scmp.lt.s32.totalorder %s21, 1
          %s219 = scalar_select %p218, %s21, 1
          %p220 = scmp.lt.s32.totalorder %s22, 1
          %s221 = scalar_select %p220, %s22, 1
          %p222 = scmp.lt.s32.totalorder %s217, 31
          %s223 = scalar_select %p222, %s217, 31
          %s224 = smul.addr %s221, 32
          %s225 = sadd.s32 %s223, %s224
          %s226 = smul.addr %s219, 64
          %s227 = sadd.s32 %s225, %s226
          %s228 = smul.addr %s227, 8
          %s229 = scalar_lea.vmem %s0, %s228
          %s230 = smul.u32 32, %s23
        $region20: #{tpu_custom_call.1} parent=15 // pred_fallthru
          _
        // Predicated region
        $region21: #{tpu_custom_call.1} parent=15 // pred_check
          %p231 = pneg %p83
        $region22: #{tpu_custom_call.1} parent=15 // pred_check_branch
          %233 = sbr.rel (%p231) target = $region24
        $region23: #{tpu_custom_call.1} parent=15 // pred_region
          %p234 = scmp.lt.s32.totalorder %s21, 1
          %s235 = scalar_select %p234, %s21, 1
          %s236 = smul.addr %s235, 2
          %s237 = scalar_lea.vmem %s1, %s236
        $region24: #{tpu_custom_call.1} parent=15 // pred_fallthru
          _
        // Predicated region
        $region25: #{tpu_custom_call.1} parent=15 // pred_check
          %p238 = pneg %p109
        $region26: #{tpu_custom_call.1} parent=15 // pred_check_branch
          %240 = sbr.rel (%p238) target = $region28
        $region27: #{tpu_custom_call.1} parent=15 // pred_region
          %p241 = scmp.lt.s32.totalorder %s21, 1
          %s242 = scalar_select %p241, %s21, 1
          %s243 = scalar_lea.vmem %s2, %s242
        $region28: #{tpu_custom_call.1} parent=15 // pred_fallthru
          _
        // Predicated region
        $region29: #{tpu_custom_call.1} parent=15 // pred_check
          %p244 = pneg %p135
        $region30: #{tpu_custom_call.1} parent=15 // pred_check_branch
          %246 = sbr.rel (%p244) target = $region32
        $region31: #{tpu_custom_call.1} parent=15 // pred_region
          %p247 = scmp.lt.s32.totalorder %s21, 1
          %s248 = scalar_select %p247, %s21, 1
          %s249 = smul.addr %s248, 16
          %s250 = smul.addr %s249, 4
          %s251 = scalar_lea.vmem %s3, %s250
        $region32: #{tpu_custom_call.1} parent=15 // pred_fallthru
          _
        // Predicated region
        $region33: #{tpu_custom_call.1} parent=15 // pred_check
          %p252 = pneg %p161
        $region34: #{tpu_custom_call.1} parent=15 // pred_check_branch
          %254 = sbr.rel (%p252) target = $region36
        $region35: #{tpu_custom_call.1} parent=15 // pred_region
          %p255 = scmp.lt.s32.totalorder %s21, 1
          %s256 = scalar_select %p255, %s21, 1
          %s257 = scalar_lea.vmem %s4, %s256
        $region36: #{tpu_custom_call.1} parent=15 // pred_fallthru
          _
      $region16: #{tpu_custom_call.1} parent=5 // pred_fallthru
        _
      %p258 = scmp.le.s32.totalorder 1, %s14
      %p259 = scmp.lt.s32.totalorder %s14, 5
      %p260 = pnand %p258, %p259
      %p261 = pneg %p260
      // Predicated region
      $region37: #{tpu_custom_call.1} parent=5 // pred_check
        _
      $region38: #{tpu_custom_call.1} parent=5 // pred_check_branch
        %263 = sbr.rel (%p260) target = $region40
      $region39: #{tpu_custom_call.1} parent=5 // pred_region
        %s264 = ssub.s32 %s14, 1
        %s265 = smul.u32 32, %s26
        %p266 = scmp.lt.s32.totalorder %s24, 1
        %s267 = scalar_select %p266, %s24, 1
        %p268 = scmp.lt.s32.totalorder %s25, 1
        %s269 = scalar_select %p268, %s25, 1
        %p270 = scmp.lt.s32.totalorder %s265, 31
        %s271 = scalar_select %p270, %s265, 31
        %s272 = smul.addr %s269, 32
        %s273 = sadd.s32 %s271, %s272
        %s274 = smul.addr %s267, 64
        %s275 = sadd.s32 %s273, %s274
        %s276 = smul.addr %s275, 8
        %s277 = scalar_lea.vmem %s0, %s276
        %p278 = pneg %p63
        %p279 = pneg %p60
        %p280 = scmp.lt.s32.totalorder %s24, 1
        %s281 = scalar_select %p280, %s24, 1
        %s282 = smul.addr %s281, 2
        %s283 = scalar_lea.vmem %s1, %s282
        %p284 = pneg %p89
        %p285 = pneg %p86
        %p286 = scmp.lt.s32.totalorder %s24, 1
        %s287 = scalar_select %p286, %s24, 1
        %s288 = scalar_lea.vmem %s2, %s287
        %p289 = pneg %p115
        %p290 = pneg %p112
        %p291 = scmp.lt.s32.totalorder %s24, 1
        %s292 = scalar_select %p291, %s24, 1
        %s293 = smul.addr %s292, 16
        %s294 = smul.addr %s293, 4
        %s295 = scalar_lea.vmem %s3, %s294
        %p296 = pneg %p141
        %p297 = pneg %p138
        %p298 = scmp.lt.s32.totalorder %s24, 1
        %s299 = scalar_select %p298, %s24, 1
        %s300 = scalar_lea.vmem %s4, %s299
        %p301 = pneg %p167
        %p302 = pneg %p164
        %p303 = pneg %p195
        %p304 = pneg %p192
        %s305 = sand.u32 %s182, 1
        %s306 = scalar_lea.sflag [#allocation4], %s305
        %s307 = sand.u32 %s182, 1
        %s308 = scalar_lea.vmem [#allocation3], %s307
        %s309 = smul.u32 32, %s26
        %p310 = scmp.lt.s32.totalorder %s24, 1
        %s311 = scalar_select %p310, %s24, 1
        %p312 = scmp.lt.s32.totalorder %s25, 1
        %s313 = scalar_select %p312, %s25, 1
        %p314 = scmp.lt.s32.totalorder %s309, 31
        %s315 = scalar_select %p314, %s309, 31
        %s316 = smul.addr %s313, 32
        %s317 = sadd.s32 %s315, %s316
        %s318 = smul.addr %s311, 64
        %s319 = sadd.s32 %s317, %s318
        %s320 = smul.addr %s319, 8
        %s321 = scalar_lea.vmem %s0, %s320
        %s322 = smul.u32 32, %s26
        %p323 = scmp.lt.s32.totalorder %s24, 1
        %s324 = scalar_select %p323, %s24, 1
        %s325 = smul.addr %s324, 2
        %s326 = scalar_lea.vmem %s1, %s325
        %p327 = scmp.lt.s32.totalorder %s24, 1
        %s328 = scalar_select %p327, %s24, 1
        %s329 = scalar_lea.vmem %s2, %s328
        %p330 = scmp.lt.s32.totalorder %s24, 1
        %s331 = scalar_select %p330, %s24, 1
        %s332 = smul.addr %s331, 16
        %s333 = smul.addr %s332, 4
        %s334 = scalar_lea.vmem %s3, %s333
        %p335 = scmp.lt.s32.totalorder %s24, 1
        %s336 = scalar_select %p335, %s24, 1
        %s337 = scalar_lea.vmem %s4, %s336
        %p339 = scmp.eq.s32.totalorder %s26, 0
        // Predicated region
        $region41: #{tpu_custom_call.1} parent=39 // pred_check
          %p340 = pneg %p339
        $region42: #{tpu_custom_call.1} parent=39 // pred_check_branch
          %342 = sbr.rel (%p340) target = $region44
        $region43: #{tpu_custom_call.1} parent=39 // pred_region
          %343 = vst [vmem:[#allocation2] sm:$0xff] -inf
          %344 = vst [vmem:[#allocation2 + $0x8] sm:$0xff] -inf
          %345 = vst [vmem:[#allocation2 + $0x10] sm:$0xff] -inf
          %346 = vst [vmem:[#allocation2 + $0x18] sm:$0xff] -inf
        $region44: #{tpu_custom_call.1} parent=39 // pred_fallthru
          _
        %v347 = vld [vmem:[%s321] sm:$0xff]
        %v348 = vld [vmem:[%s321 + $0x8] sm:$0xff]
        %v349 = vld [vmem:[%s321 + $0x10] sm:$0xff]
        %v350 = vld [vmem:[%s321 + $0x18] sm:$0xff]
        %v351 = vld [vmem:[%s321 + $0x20] sm:$0xff]
        %v352 = vld [vmem:[%s321 + $0x28] sm:$0xff]
        %v353 = vld [vmem:[%s321 + $0x30] sm:$0xff]
        %v354 = vld [vmem:[%s321 + $0x38] sm:$0xff]
        %v355 = vld [vmem:[%s321 + $0x40] sm:$0xff]
        %v356 = vld [vmem:[%s321 + $0x48] sm:$0xff]
        %v357 = vld [vmem:[%s321 + $0x50] sm:$0xff]
        %v358 = vld [vmem:[%s321 + $0x58] sm:$0xff]
        %v359 = vld [vmem:[%s321 + $0x60] sm:$0xff]
        %v360 = vld [vmem:[%s321 + $0x68] sm:$0xff]
        %v361 = vld [vmem:[%s321 + $0x70] sm:$0xff]
        %v362 = vld [vmem:[%s321 + $0x78] sm:$0xff]
        %v363 = vld [vmem:[%s321 + $0x80] sm:$0xff]
        %v364 = vld [vmem:[%s321 + $0x88] sm:$0xff]
        %v365 = vld [vmem:[%s321 + $0x90] sm:$0xff]
        %v366 = vld [vmem:[%s321 + $0x98] sm:$0xff]
        %v367 = vld [vmem:[%s321 + $0xa0] sm:$0xff]
        %v368 = vld [vmem:[%s321 + $0xa8] sm:$0xff]
        %v369 = vld [vmem:[%s321 + $0xb0] sm:$0xff]
        %v370 = vld [vmem:[%s321 + $0xb8] sm:$0xff]
        %v371 = vld [vmem:[%s321 + $0xc0] sm:$0xff]
        %v372 = vld [vmem:[%s321 + $0xc8] sm:$0xff]
        %v373 = vld [vmem:[%s321 + $0xd0] sm:$0xff]
        %v374 = vld [vmem:[%s321 + $0xd8] sm:$0xff]
        %v375 = vld [vmem:[%s321 + $0xe0] sm:$0xff]
        %v376 = vld [vmem:[%s321 + $0xe8] sm:$0xff]
        %v377 = vld [vmem:[%s321 + $0xf0] sm:$0xff]
        %v378 = vld [vmem:[%s321 + $0xf8] sm:$0xff]
        %v379 = vpack.c.bf16 %v348, %v347
        %v380 = vpack.c.bf16 %v350, %v349
        %v381 = vpack.c.bf16 %v352, %v351
        %v382 = vpack.c.bf16 %v354, %v353
        %v383 = vpack.c.bf16 %v356, %v355
        %v384 = vpack.c.bf16 %v358, %v357
        %v385 = vpack.c.bf16 %v360, %v359
        %v386 = vpack.c.bf16 %v362, %v361
        %v387 = vpack.c.bf16 %v364, %v363
        %v388 = vpack.c.bf16 %v366, %v365
        %v389 = vpack.c.bf16 %v368, %v367
        %v390 = vpack.c.bf16 %v370, %v369
        %v391 = vpack.c.bf16 %v372, %v371
        %v392 = vpack.c.bf16 %v374, %v373
        %v393 = vpack.c.bf16 %v376, %v375
        %v394 = vpack.c.bf16 %v378, %v377
        %v395 = vld [vmem:[%s326] sm:$0x3]
        %v396 = vld [vmem:[%s329] sm:$0x1]
        %v398 = vlaneseq
        %v399 = vshrl.u32 %v398, 7
        %v400 = vsub.s32 0, %v399
        %v401 = vrot.slane %v396, %v400
        %vm403 = vcmask 23552
        %v405 = vsel %vm403, %v379, 0
        %v408 = vsel %vm403, %v380, 0
        %v411 = vsel %vm403, %v381, 0
        %v414 = vsel %vm403, %v382, 0
        %v417 = vsel %vm403, %v383, 0
        %v420 = vsel %vm403, %v384, 0
        %v423 = vsel %vm403, %v385, 0
        %v426 = vsel %vm403, %v386, 0
        %v429 = vsel %vm403, %v387, 0
        %v432 = vsel %vm403, %v388, 0
        %v435 = vsel %vm403, %v389, 0
        %v438 = vsel %vm403, %v390, 0
        %v441 = vsel %vm403, %v391, 0
        %v444 = vsel %vm403, %v392, 0
        %v447 = vsel %vm403, %v393, 0
        %v450 = vsel %vm403, %v394, 0
        %vm452 = vcmask 1040384
        %vm453 = vcmask 1041408
        %v454 = vsel %vm452, 4294967295, 65535
        %v455 = vsel %vm453, %v454, 0
        %v457 = vand.u32 %v395, %v455
        %459 = vmatprep.subr.bf16.mxu0 0
        %460 = vmatpush1.bf16.msra.mxu0 %v457
        %461 = vmatprep.subr.bf16.mxu0 0
        %462 = vmatpush1.bf16.msra.mxu0 0
        %463 = vmatprep.subr.bf16.mxu0 0
        %464 = vmatpush1.bf16.msra.mxu0 0
        %465 = vmatprep.subr.bf16.mxu0 0
        %466 = vmatpush1.bf16.msra.mxu0 0
        %467 = vmatprep.subr.bf16.mxu0 0
        %468 = vmatpush1.bf16.msra.mxu0 0
        %469 = vmatprep.subr.bf16.mxu0 0
        %470 = vmatpush1.bf16.msra.mxu0 0
        %471 = vmatprep.subr.bf16.mxu0 0
        %472 = vmatpush1.bf16.msra.mxu0 0
        %473 = vmatprep.subr.bf16.mxu0 0
        %474 = vmatpush1.bf16.msra.mxu0 0
        %475 = vmatprep.subr.bf16.mxu0 0
        %476 = vmatpush1.bf16.msra.mxu0 0
        %477 = vmatprep.subr.bf16.mxu0 0
        %478 = vmatpush1.bf16.msra.mxu0 0
        %479 = vmatprep.subr.bf16.mxu0 0
        %480 = vmatpush1.bf16.msra.mxu0 0
        %481 = vmatprep.subr.bf16.mxu0 0
        %482 = vmatpush1.bf16.msra.mxu0 0
        %483 = vmatprep.subr.bf16.mxu0 0
        %484 = vmatpush1.bf16.msra.mxu0 0
        %485 = vmatprep.subr.bf16.mxu0 0
        %486 = vmatpush1.bf16.msra.mxu0 0
        %487 = vmatprep.subr.bf16.mxu0 0
        %488 = vmatpush1.bf16.msra.mxu0 0
        %489 = vmatprep.subr.bf16.mxu0 0
        %490 = vmatpush1.bf16.msra.mxu0 0
        %491 = vmatprep.mubr.bf16.mxu0 0
        %492 = vmatmul.mubr.bf16.gmra.mrb[0].mxu0 %v405
        %v493 = vpop.f32.mrb[0].mxu0
        %v494 = vadd.f32 %v401, %v493
        %v495 = vpop.f32.mrb[0].mxu0
        %v496 = vpop.f32.mrb[0].mxu0
        %v497 = vadd.f32 %v401, %v496
        %v498 = vpop.f32.mrb[0].mxu0
        %499 = vmatprep.mubr.bf16.mxu0 0
        %500 = vmatmul.mubr.bf16.gmra.mrb[0].mxu0 %v408
        %v501 = vpop.f32.mrb[0].mxu0
        %v502 = vadd.f32 %v401, %v501
        %v503 = vpop.f32.mrb[0].mxu0
        %v504 = vpop.f32.mrb[0].mxu0
        %v505 = vadd.f32 %v401, %v504
        %v506 = vpop.f32.mrb[0].mxu0
        %507 = vmatprep.mubr.bf16.mxu0 0
        %508 = vmatmul.mubr.bf16.gmra.mrb[0].mxu0 %v411
        %v509 = vpop.f32.mrb[0].mxu0
        %v510 = vadd.f32 %v401, %v509
        %v511 = vpop.f32.mrb[0].mxu0
        %v512 = vpop.f32.mrb[0].mxu0
        %v513 = vadd.f32 %v401, %v512
        %v514 = vpop.f32.mrb[0].mxu0
        %515 = vmatprep.mubr.bf16.mxu0 0
        %516 = vmatmul.mubr.bf16.gmra.mrb[0].mxu0 %v414
        %v517 = vpop.f32.mrb[0].mxu0
        %v518 = vadd.f32 %v401, %v517
        %v519 = vpop.f32.mrb[0].mxu0
        %v520 = vpop.f32.mrb[0].mxu0
        %v521 = vadd.f32 %v401, %v520
        %v522 = vpop.f32.mrb[0].mxu0
        %523 = vmatprep.mubr.bf16.mxu0 0
        %524 = vmatmul.mubr.bf16.gmra.mrb[0].mxu0 %v417
        %v525 = vpop.f32.mrb[0].mxu0
        %v526 = vadd.f32 %v401, %v525
        %v527 = vpop.f32.mrb[0].mxu0
        %v528 = vpop.f32.mrb[0].mxu0
        %v529 = vadd.f32 %v401, %v528
        %v530 = vpop.f32.mrb[0].mxu0
        %531 = vmatprep.mubr.bf16.mxu0 0
        %532 = vmatmul.mubr.bf16.gmra.mrb[0].mxu0 %v420
        %v533 = vpop.f32.mrb[0].mxu0
        %v534 = vadd.f32 %v401, %v533
        %v535 = vpop.f32.mrb[0].mxu0
        %v536 = vpop.f32.mrb[0].mxu0
        %v537 = vadd.f32 %v401, %v536
        %v538 = vpop.f32.mrb[0].mxu0
        %539 = vmatprep.mubr.bf16.mxu0 0
        %540 = vmatmul.mubr.bf16.gmra.mrb[0].mxu0 %v423
        %v541 = vpop.f32.mrb[0].mxu0
        %v542 = vadd.f32 %v401, %v541
        %v543 = vpop.f32.mrb[0].mxu0
        %v544 = vpop.f32.mrb[0].mxu0
        %v545 = vadd.f32 %v401, %v544
        %v546 = vpop.f32.mrb[0].mxu0
        %547 = vmatprep.mubr.bf16.mxu0 0
        %548 = vmatmul.mubr.bf16.gmra.mrb[0].mxu0 %v426
        %v549 = vpop.f32.mrb[0].mxu0
        %v550 = vadd.f32 %v401, %v549
        %v551 = vpop.f32.mrb[0].mxu0
        %v552 = vpop.f32.mrb[0].mxu0
        %v553 = vadd.f32 %v401, %v552
        %v554 = vpop.f32.mrb[0].mxu0
        %555 = vmatprep.mubr.bf16.mxu0 0
        %556 = vmatmul.mubr.bf16.gmra.mrb[0].mxu0 %v429
        %v557 = vpop.f32.mrb[0].mxu0
        %v558 = vadd.f32 %v401, %v557
        %v559 = vpop.f32.mrb[0].mxu0
        %v560 = vpop.f32.mrb[0].mxu0
        %v561 = vadd.f32 %v401, %v560
        %v562 = vpop.f32.mrb[0].mxu0
        %563 = vmatprep.mubr.bf16.mxu0 0
        %564 = vmatmul.mubr.bf16.gmra.mrb[0].mxu0 %v432
        %v565 = vpop.f32.mrb[0].mxu0
        %v566 = vadd.f32 %v401, %v565
        %v567 = vpop.f32.mrb[0].mxu0
        %v568 = vpop.f32.mrb[0].mxu0
        %v569 = vadd.f32 %v401, %v568
        %v570 = vpop.f32.mrb[0].mxu0
        %571 = vmatprep.mubr.bf16.mxu0 0
        %572 = vmatmul.mubr.bf16.gmra.mrb[0].mxu0 %v435
        %v573 = vpop.f32.mrb[0].mxu0
        %v574 = vadd.f32 %v401, %v573
        %v575 = vpop.f32.mrb[0].mxu0
        %v576 = vpop.f32.mrb[0].mxu0
        %v577 = vadd.f32 %v401, %v576
        %v578 = vpop.f32.mrb[0].mxu0
        %579 = vmatprep.mubr.bf16.mxu0 0
        %580 = vmatmul.mubr.bf16.gmra.mrb[0].mxu0 %v438
        %v581 = vpop.f32.mrb[0].mxu0
        %v582 = vadd.f32 %v401, %v581
        %v583 = vpop.f32.mrb[0].mxu0
        %v584 = vpop.f32.mrb[0].mxu0
        %v585 = vadd.f32 %v401, %v584
        %v586 = vpop.f32.mrb[0].mxu0
        %587 = vmatprep.mubr.bf16.mxu0 0
        %588 = vmatmul.mubr.bf16.gmra.mrb[0].mxu0 %v441
        %v589 = vpop.f32.mrb[0].mxu0
        %v590 = vadd.f32 %v401, %v589
        %v591 = vpop.f32.mrb[0].mxu0
        %v592 = vpop.f32.mrb[0].mxu0
        %v593 = vadd.f32 %v401, %v592
        %v594 = vpop.f32.mrb[0].mxu0
        %595 = vmatprep.mubr.bf16.mxu0 0
        %596 = vmatmul.mubr.bf16.gmra.mrb[0].mxu0 %v444
        %v597 = vpop.f32.mrb[0].mxu0
        %v598 = vadd.f32 %v401, %v597
        %v599 = vpop.f32.mrb[0].mxu0
        %v600 = vpop.f32.mrb[0].mxu0
        %v601 = vadd.f32 %v401, %v600
        %v602 = vpop.f32.mrb[0].mxu0
        %603 = vmatprep.mubr.bf16.mxu0 0
        %604 = vmatmul.mubr.bf16.gmra.mrb[0].mxu0 %v447
        %v605 = vpop.f32.mrb[0].mxu0
        %v606 = vadd.f32 %v401, %v605
        %v607 = vpop.f32.mrb[0].mxu0
        %v608 = vpop.f32.mrb[0].mxu0
        %v609 = vadd.f32 %v401, %v608
        %v610 = vpop.f32.mrb[0].mxu0
        %611 = vmatprep.mubr.bf16.mxu0 0
        %612 = vmatmul.mubr.bf16.gmra.mrb[0].mxu0 %v450
        %v613 = vpop.f32.mrb[0].mxu0
        %v614 = vadd.f32 %v401, %v613
        %v615 = vpop.f32.mrb[0].mxu0
        %v616 = vpop.f32.mrb[0].mxu0
        %v617 = vadd.f32 %v401, %v616
        %v618 = vpop.f32.mrb[0].mxu0
        %619 = vdwg.mxu0
        %v620 = vmax.f32 %v494, 0.0
        %v621 = vmax.f32 %v497, 0.0
        %v622 = vmax.f32 %v502, 0.0
        %v623 = vmax.f32 %v505, 0.0
        %v624 = vmax.f32 %v510, 0.0
        %v625 = vmax.f32 %v513, 0.0
        %v626 = vmax.f32 %v518, 0.0
        %v627 = vmax.f32 %v521, 0.0
        %v628 = vmax.f32 %v526, 0.0
        %v629 = vmax.f32 %v529, 0.0
        %v630 = vmax.f32 %v534, 0.0
        %v631 = vmax.f32 %v537, 0.0
        %v632 = vmax.f32 %v542, 0.0
        %v633 = vmax.f32 %v545, 0.0
        %v634 = vmax.f32 %v550, 0.0
        %v635 = vmax.f32 %v553, 0.0
        %v636 = vmax.f32 %v558, 0.0
        %v637 = vmax.f32 %v561, 0.0
        %v638 = vmax.f32 %v566, 0.0
        %v639 = vmax.f32 %v569, 0.0
        %v640 = vmax.f32 %v574, 0.0
        %v641 = vmax.f32 %v577, 0.0
        %v642 = vmax.f32 %v582, 0.0
        %v643 = vmax.f32 %v585, 0.0
        %v644 = vmax.f32 %v590, 0.0
        %v645 = vmax.f32 %v593, 0.0
        %v646 = vmax.f32 %v598, 0.0
        %v647 = vmax.f32 %v601, 0.0
        %v648 = vmax.f32 %v606, 0.0
        %v649 = vmax.f32 %v609, 0.0
        %v650 = vmax.f32 %v614, 0.0
        %v651 = vmax.f32 %v617, 0.0
        %v652 = vmax.f32 %v620, %v624
        %v653 = vmax.f32 %v652, %v628
        %v654 = vmax.f32 %v653, %v632
        %v655 = vmax.f32 %v654, %v636
        %v656 = vmax.f32 %v655, %v640
        %v657 = vmax.f32 %v656, %v644
        %v658 = vmax.f32 %v657, %v648
        %v659 = vmax.f32 %v621, %v625
        %v660 = vmax.f32 %v659, %v629
        %v661 = vmax.f32 %v660, %v633
        %v662 = vmax.f32 %v661, %v637
        %v663 = vmax.f32 %v662, %v641
        %v664 = vmax.f32 %v663, %v645
        %v665 = vmax.f32 %v664, %v649
        %v666 = vmax.f32 %v622, %v626
        %v667 = vmax.f32 %v666, %v630
        %v668 = vmax.f32 %v667, %v634
        %v669 = vmax.f32 %v668, %v638
        %v670 = vmax.f32 %v669, %v642
        %v671 = vmax.f32 %v670, %v646
        %v672 = vmax.f32 %v671, %v650
        %v673 = vmax.f32 %v623, %v627
        %v674 = vmax.f32 %v673, %v631
        %v675 = vmax.f32 %v674, %v635
        %v676 = vmax.f32 %v675, %v639
        %v677 = vmax.f32 %v676, %v643
        %v678 = vmax.f32 %v677, %v647
        %v679 = vmax.f32 %v678, %v651
        %v680 = vld [vmem:[#allocation2] sm:$0xff]
        %v681 = vld [vmem:[#allocation2 + $0x8] sm:$0xff]
        %v682 = vld [vmem:[#allocation2 + $0x10] sm:$0xff]
        %v683 = vld [vmem:[#allocation2 + $0x18] sm:$0xff]
        %v684 = vmax.f32 %v680, %v658
        %v685 = vmax.f32 %v681, %v665
        %v686 = vmax.f32 %v682, %v672
        %v687 = vmax.f32 %v683, %v679
        %688 = vst [vmem:[#allocation2] sm:$0xff] %v684
        %689 = vst [vmem:[#allocation2 + $0x8] sm:$0xff] %v685
        %690 = vst [vmem:[#allocation2 + $0x10] sm:$0xff] %v686
        %691 = vst [vmem:[#allocation2 + $0x18] sm:$0xff] %v687
        // Predicated region
        $region45: #{tpu_custom_call.1} parent=39 // pred_check
          %p692 = pneg %p339
        $region46: #{tpu_custom_call.1} parent=39 // pred_check_branch
          %694 = sbr.rel (%p692) target = $region48
        $region47: #{tpu_custom_call.1} parent=39 // pred_region
          %v695 = vld [vmem:[#allocation2] sm:$0xff]
          %v696 = vld [vmem:[#allocation2 + $0x8] sm:$0xff]
          %v697 = vld [vmem:[#allocation2 + $0x10] sm:$0xff]
          %v698 = vld [vmem:[#allocation2 + $0x18] sm:$0xff]
          %v699 = vmax.f32 %v695, %v696
          %v700 = vmax.f32 %v697, %v698
          %v701 = vmax.f32 %v699, %v700
          %v702 = vrot.slane %v701, 4
          %v703 = vmax.f32 %v701, %v702
          %v704 = vrot.slane %v703, 2
          %v705 = vmax.f32 %v703, %v704
          %v706 = vrot.slane %v705, 1
          %v707 = vmax.f32 %v705, %v706
          %v708 = vpack.c.bf16 %v707, %v707
          %v709 = vld [vmem:[%s334] sm:$0xf]
          %v710 = vld [vmem:[%s334 + $0x4] sm:$0xf]
          %v711 = vld [vmem:[%s334 + $0x8] sm:$0xf]
          %v712 = vld [vmem:[%s334 + $0xc] sm:$0xf]
          %v713 = vld [vmem:[%s334 + $0x10] sm:$0xf]
          %v714 = vld [vmem:[%s334 + $0x14] sm:$0xf]
          %v715 = vld [vmem:[%s334 + $0x18] sm:$0xf]
          %v716 = vld [vmem:[%s334 + $0x1c] sm:$0xf]
          %v717 = vld [vmem:[%s334 + $0x20] sm:$0xf]
          %v718 = vld [vmem:[%s334 + $0x24] sm:$0xf]
          %v719 = vld [vmem:[%s334 + $0x28] sm:$0xf]
          %v720 = vld [vmem:[%s334 + $0x2c] sm:$0xf]
          %v721 = vld [vmem:[%s334 + $0x30] sm:$0xf]
          %v722 = vld [vmem:[%s334 + $0x34] sm:$0xf]
          %v723 = vld [vmem:[%s334 + $0x38] sm:$0xf]
          %v724 = vld [vmem:[%s334 + $0x3c] sm:$0xf]
          %v725 = vld [vmem:[%s337] sm:$0x1]
          %v742 = vunpack.c.l.b16 %v709
          %v743 = vunpack.c.l.b16 %v710
          %v744 = vunpack.c.l.b16 %v711
          %v745 = vunpack.c.l.b16 %v712
          %v746 = vunpack.c.l.b16 %v713
          %v747 = vunpack.c.l.b16 %v714
          %v748 = vunpack.c.l.b16 %v715
          %v749 = vunpack.c.l.b16 %v716
          %v750 = vunpack.c.l.b16 %v717
          %v751 = vunpack.c.l.b16 %v718
          %v752 = vunpack.c.l.b16 %v719
          %v753 = vunpack.c.l.b16 %v720
          %v754 = vunpack.c.l.b16 %v721
          %v755 = vunpack.c.l.b16 %v722
          %v756 = vunpack.c.l.b16 %v723
          %v757 = vunpack.c.l.b16 %v724
          %v758 = vpack.c.b16 %v743, %v742
          %v759 = vpack.c.b16 %v745, %v744
          %v760 = vpack.c.b16 %v747, %v746
          %v761 = vpack.c.b16 %v749, %v748
          %v762 = vpack.c.b16 %v751, %v750
          %v763 = vpack.c.b16 %v753, %v752
          %v764 = vpack.c.b16 %v755, %v754
          %v765 = vpack.c.b16 %v757, %v756
          %774 = vmatprep.subr.bf16.mxu0 0
          %775 = vmatpush1.bf16.msra.mxu0 %v758
          %776 = vmatprep.subr.bf16.mxu0 0
          %777 = vmatpush1.bf16.msra.mxu0 %v759
          %778 = vmatprep.subr.bf16.mxu0 0
          %779 = vmatpush1.bf16.msra.mxu0 %v760
          %780 = vmatprep.subr.bf16.mxu0 0
          %781 = vmatpush1.bf16.msra.mxu0 %v761
          %782 = vmatprep.subr.bf16.mxu0 0
          %783 = vmatpush1.bf16.msra.mxu0 %v762
          %784 = vmatprep.subr.bf16.mxu0 0
          %785 = vmatpush1.bf16.msra.mxu0 %v763
          %786 = vmatprep.subr.bf16.mxu0 0
          %787 = vmatpush1.bf16.msra.mxu0 %v764
          %788 = vmatprep.subr.bf16.mxu0 0
          %789 = vmatpush1.bf16.msra.mxu0 %v765
          %790 = vmatprep.subr.bf16.mxu0 0
          %791 = vmatpush1.bf16.msra.mxu0 0
          %792 = vmatprep.subr.bf16.mxu0 0
          %793 = vmatpush1.bf16.msra.mxu0 0
          %794 = vmatprep.subr.bf16.mxu0 0
          %795 = vmatpush1.bf16.msra.mxu0 0
          %796 = vmatprep.subr.bf16.mxu0 0
          %797 = vmatpush1.bf16.msra.mxu0 0
          %798 = vmatprep.subr.bf16.mxu0 0
          %799 = vmatpush1.bf16.msra.mxu0 0
          %800 = vmatprep.subr.bf16.mxu0 0
          %801 = vmatpush1.bf16.msra.mxu0 0
          %802 = vmatprep.subr.bf16.mxu0 0
          %803 = vmatpush1.bf16.msra.mxu0 0
          %804 = vmatprep.subr.bf16.mxu0 0
          %805 = vmatpush1.bf16.msra.mxu0 0
          %806 = vmatprep.mubr.bf16.mxu0 0
          %807 = vmatmul.mubr.bf16.gmra.mrb[0].mxu0 %v708
          %v808 = vpop.f32.mrb[0].mxu0
          %v809 = vadd.f32 %v725, %v808
          %v810 = vpop.f32.mrb[0].mxu0
          %v811 = vpop.f32.mrb[0].mxu0
          %v812 = vpop.f32.mrb[0].mxu0
          %813 = vdwg.mxu0
          %vm814 = vcmask 516096
          %815 = vst.msk [vmem:[%s308] sm:$0x1] %vm814, %v809
        $region48: #{tpu_custom_call.1} parent=39 // pred_fallthru
          _
        %s816 = sand.u32 %s182, 1
        %s817 = scalar_lea.sflag [#allocation4], %s816
        %s818 = sand.u32 %s182, 1
        %s819 = scalar_lea.vmem [#allocation3], %s818
        // Predicated region
        $region49: #{tpu_custom_call.1} parent=39 // pred_check
          %p820 = pneg %p192
        $region50: #{tpu_custom_call.1} parent=39 // pred_check_branch
          %822 = sbr.rel (%p820) target = $region52
        $region51: #{tpu_custom_call.1} parent=39 // pred_region
          %s824 = ssub.s32 16, 16
          %825 = vsyncadd %s817, %s824
          %s826 = smul.addr %s24, 2
          %s827 = sadd.s32 %s25, %s826
          %s828 = smul.addr %s827, 16
          %s829 = scalar_lea.hbm %s5, %s828
          %s831 = sshll.u32 %s819, 4
          %s832 = int_to_ptr.vmem [resolvable:$true] %s831
          %834 = dma.vmem_to_hbm [thread:$0]  %s832, 16, %s829, %s817
        $region52: #{tpu_custom_call.1} parent=39 // pred_fallthru
          _
      $region40: #{tpu_custom_call.1} parent=5 // pred_fallthru
        _
      %p835 = scmp.le.s32.totalorder 2, %s14
      // Predicated region
      $region53: #{tpu_custom_call.1} parent=5 // pred_check
        %p836 = pneg %p835
      $region54: #{tpu_custom_call.1} parent=5 // pred_check_branch
        %838 = sbr.rel (%p836) target = $region56
      $region55: #{tpu_custom_call.1} parent=5 // pred_region
        %s839 = ssub.s32 %s14, 2
        // Predicated region
        $region57: #{tpu_custom_call.1} parent=55 // pred_check
          %p840 = pneg %p198
        $region58: #{tpu_custom_call.1} parent=55 // pred_check_branch
          %842 = sbr.rel (%p840) target = $region60
        $region59: #{tpu_custom_call.1} parent=55 // pred_region
          %s843 = sand.u32 %s183, 1
          %s844 = scalar_lea.sflag [#allocation4], %s843
          %s845 = sand.u32 %s183, 1
          %s846 = scalar_lea.vmem [#allocation3], %s845
          %847 = dma.done %s844, 16
        $region60: #{tpu_custom_call.1} parent=55 // pred_fallthru
          _
      $region56: #{tpu_custom_call.1} parent=5 // pred_fallthru
        _
    $region6: #{tpu_custom_call.1} parent=1 // loop_footer
      %s18 = sadd.s32 1, %s14
    $region7: #{tpu_custom_call.1} parent=1 // loop_footer_branch
      %13 = sbr.rel target = $region3
    $region8: #{tpu_custom_call.1} parent=1 // loop_exit
      _
    %848 = vsyncpa [#allocation4], 1
    %s849 = scalar_lea.sflag [#allocation4], 1
    %850 = vsyncpa %s849, 1

</llo_original>
